<compile_context>
chip_gen: v7x
topology: tpu7x:2x2x1
jax: 0.10.0
libtpu: 0.0.40
codegen_flags: <defaults>
</compile_context>

<pallas_src>
import jax
import jax.numpy as jnp
from jax.experimental import pallas as pl
from jax.experimental.pallas import tpu as pltpu

_LANE_COLS = 1024        # lane-dense width: large multiple of 128 -> unmasked vst
_TILE_ROWS = 512         # 512 x 1024 f32 tile = 2 MiB; 2 bufs x (in+out) = 8 MiB VMEM
_SMALL_BYTES = 1 << 20   # below ~1 MiB, launch overhead dwarfs the copy -> skip kernel


def _identity_kernel(x_ref, o_ref):
    # The entire "forward" of Empty: pass the tile through unchanged.
    o_ref[...] = x_ref[...]


def _round_up(n, m):
    return ((n + m - 1) // m) * m


def _pallas_identity_copy(x):
    """Materialized identity copy via a lane-dense, tiled Pallas kernel."""
    orig_shape = x.shape
    orig_dtype = x.dtype
    n = x.size
    if n == 0:
        return x

    # Flatten and repack to (rows, _LANE_COLS) so every store is a full
    # 128-lane vst (no masked partial stores from a narrow last dim).
    flat = x.reshape(-1)
    rows = _round_up(n, _LANE_COLS) // _LANE_COLS

    if rows > _TILE_ROWS:
        tr = _TILE_ROWS
        padded_rows = _round_up(rows, _TILE_ROWS)
    elif rows >= 8:
        padded_rows = _round_up(rows, 8)
        tr = padded_rows
    else:
        padded_rows = rows
        tr = rows  # < 8 rows: full-extent block is allowed

    padded_n = padded_rows * _LANE_COLS
    if padded_n != n:
        flat = jnp.pad(flat, (0, padded_n - n))
    x2d = flat.reshape(padded_rows, _LANE_COLS)

    y2d = pl.pallas_call(
        _identity_kernel,
        out_shape=jax.ShapeDtypeStruct((padded_rows, _LANE_COLS), orig_dtype),
        grid=(padded_rows // tr,),
        in_specs=[pl.BlockSpec((tr, _LANE_COLS), lambda i: (i, 0))],
        out_specs=pl.BlockSpec((tr, _LANE_COLS), lambda i: (i, 0)),
        compiler_params=pltpu.CompilerParams(
            dimension_semantics=("parallel",)
        ),
    )(x2d)

    return y2d.reshape(-1)[:n].reshape(orig_shape)


def _identity(x, materialize=False):
    """Identity. Default: zero-cost pass-through (the optimal kernel is no
    kernel). With materialize=True, returns a fresh buffer via Pallas when the
    array is large enough to amortize launch overhead."""
    if not materialize:
        return x
    if x.size * x.dtype.itemsize < _SMALL_BYTES:
        return x  # tiny input: a copy kernel is a guaranteed regression
    return _pallas_identity_copy(x)


def empty_forward(*args, **kwargs):
    """Exact semantics of torchplus Empty.forward:
       - 1 positional arg  -> return it unchanged
       - 0 positional args -> return None
       - >1 positional args -> return the args tuple
       kwargs are ignored, exactly like the PyTorch module."""
    if len(args) == 1:
        return args[0]
    elif len(args) == 0:
        return None
    return args


if __name__ == "__main__":
    key = jax.random.PRNGKey(0)
    k1, k2 = jax.random.split(key)

    # Example inputs consistent with a conv-style feature map (NCHW) + a 2D tensor.
    x = jax.random.normal(k1, (2, 4, 16, 16), dtype=jnp.float32)
    z = jax.random.normal(k2, (8, 32), dtype=jnp.float32)

    # --- Module semantics (optimal path: zero data movement) ---
    y = empty_forward(x)
    assert y is x and y.shape == x.shape and y.dtype == x.dtype
    assert empty_forward() is None
    outs = empty_forward(x, z, ignored_kwarg=123)
    assert isinstance(outs, tuple) and len(outs) == 2
    assert outs[0] is x and outs[1] is z

    # --- Exercise the Pallas identity-copy kernel once (materialized path) ---
    yc = jax.block_until_ready(_pallas_identity_copy(x))
    assert yc.shape == x.shape and yc.dtype == x.dtype
    assert bool(jnp.all(yc == x))

    zc = jax.block_until_ready(_pallas_identity_copy(z))
    assert zc.shape == z.shape and zc.dtype == z.dtype
    assert bool(jnp.all(zc == z))

    # Size-gated materialized wrapper (small inputs bypass the kernel entirely).
    ym = jax.block_until_ready(_identity(x, materialize=True))
    assert bool(jnp.all(ym == x))

    print("KERNEL_OK")
</pallas_src>

<mosaic_0001>
module attributes {stable_mosaic.version = 11 : i64} {
  func.func @_identity_kernel(%arg0: i32, %arg1: memref<2x1024xf32, #tpu.memory_space<vmem>>, %arg2: memref<2x1024xf32, #tpu.memory_space<vmem>>) attributes {dimension_semantics = [#tpu.dimension_semantics<parallel>], iteration_bounds = array<i64: 1>, scalar_prefetch = 0 : i64, scratch_operands = 0 : i64, tpu.core_type = #tpu.core_type<tc>, window_params = [{transform_indices = @transform_0, window_bounds = array<i64: 2, 1024>}, {transform_indices = @transform_1, window_bounds = array<i64: 2, 1024>}]} {
    %c0 = arith.constant 0 : index
    %c0_0 = arith.constant 0 : index
    %0 = vector.load %arg1[%c0, %c0_0] : memref<2x1024xf32, #tpu.memory_space<vmem>>, vector<2x1024xf32>
    %c0_1 = arith.constant 0 : index
    %c0_2 = arith.constant 0 : index
    %1 = vector.load %arg2[%c0_1, %c0_2] : memref<2x1024xf32, #tpu.memory_space<vmem>>, vector<2x1024xf32>
    tpu.vector_store %arg2[%c0_1, %c0_2], %0 {strides = array<i32>} : memref<2x1024xf32, #tpu.memory_space<vmem>>, vector<2x1024xf32>,
    return
  }
  func.func @transform_0(%arg0: i32) -> (i32, i32) {
    %c0_i32 = arith.constant 0 : i32
    %c0_i32_0 = arith.constant 0 : i32
    return %arg0, %c0_i32 : i32, i32
  }
  func.func @transform_1(%arg0: i32) -> (i32, i32) {
    %c0_i32 = arith.constant 0 : i32
    %c0_i32_0 = arith.constant 0 : i32
    return %arg0, %c0_i32 : i32, i32
  }
}

</mosaic_0001>

<llo_original>
// kernel: tpu_custom_call.1
$region0: #{tpu_custom_call.1}
  #allocation0 [shape = 'u32[]', space=smem, size = 0x4, offset = 0x4, fixed_abs, tag = 'smem constant byte address 0x4 - core index']
  #allocation1 [shape = 'u32[144,128]{1,0:T(1,128)}', space=vmem, size = 0x12000, scoped, tag = 'internal scratch']
  %s0 = inlined_call_operand.hbm [shape: f32[2,1024], index: 0, kind: input, shape index: {}]
  %s1 = inlined_call_operand.hbm [shape: f32[2,1024], index: 1, kind: output, shape index: {}]
  %s2 = sld [smem:[#allocation0]]
  $region18: #{tpu_custom_call.1} parent=0
    _
  %s4 = ssub.s32 1, %s2
  %s5 = scalar_select 0, %s4, %s2
  $region1: #{tpu_custom_call.1} parent=0
    #allocation2 [shape = 'u8[8192]{0}', space=vmem, size = 0x2000, scoped, tag = 'input window, operand 0, single buffered']
    #allocation3 [shape = 's32[1]{0}', space=sflag, size = 0x4, scoped, tag = 'scoped memory for tpu_custom_call.1']
    #allocation4 [shape = 's32[1]{0}', space=sflag, size = 0x4, scoped, tag = 'scoped memory for tpu_custom_call.1']
    #allocation5 [shape = 'u8[8192]{0}', space=vmem, size = 0x2000, scoped, tag = 'output window, operand 0, single buffered']
    %6 = vsyncpa [#allocation3], 0
    %7 = vsyncpa [#allocation4], 0
    // Predicated region
    $region2: #{tpu_custom_call.1} parent=1 // pred_check
      _
    $region3: #{tpu_custom_call.1} parent=1 // pred_check_branch
      %9 = sbr.rel (0) target = $region5
    $region4: #{tpu_custom_call.1} parent=1 // pred_region
      %s11 = ssub.s32 256, 256
      %12 = vsyncadd [#allocation3], %s11
      %s14 = sshll.u32 [#allocation2], 4
      %s15 = int_to_ptr.vmem [resolvable:$true] %s14
      %17 = dma.hbm_to_vmem [thread:$0]  %s0, 256, %s15, [#allocation3]
    $region5: #{tpu_custom_call.1} parent=1 // pred_fallthru
      _
    // Predicated region
    $region6: #{tpu_custom_call.1} parent=1 // pred_check
      _
    $region7: #{tpu_custom_call.1} parent=1 // pred_check_branch
      %19 = sbr.rel (0) target = $region9
    $region8: #{tpu_custom_call.1} parent=1 // pred_region
      %20 = dma.done [#allocation3], 256
    $region9: #{tpu_custom_call.1} parent=1 // pred_fallthru
      _
    %v21 = vld [vmem:[#allocation2] sm:$0xff]
    %v22 = vld [vmem:[#allocation2 + $0x8] sm:$0xff]
    %23 = vst [vmem:[#allocation5] sm:$0xff] %v21
    %24 = vst [vmem:[#allocation5 + $0x8] sm:$0xff] %v22
    // Predicated region
    $region10: #{tpu_custom_call.1} parent=1 // pred_check
      _
    $region11: #{tpu_custom_call.1} parent=1 // pred_check_branch
      %26 = sbr.rel (0) target = $region13
    $region12: #{tpu_custom_call.1} parent=1 // pred_region
      %s28 = ssub.s32 256, 256
      %29 = vsyncadd [#allocation4], %s28
      %s31 = sshll.u32 [#allocation5], 4
      %s32 = int_to_ptr.vmem [resolvable:$true] %s31
      %34 = dma.vmem_to_hbm [thread:$0]  %s32, 256, %s1, [#allocation4]
    $region13: #{tpu_custom_call.1} parent=1 // pred_fallthru
      _
    // Predicated region
    $region14: #{tpu_custom_call.1} parent=1 // pred_check
      _
    $region15: #{tpu_custom_call.1} parent=1 // pred_check_branch
      %36 = sbr.rel (0) target = $region17
    $region16: #{tpu_custom_call.1} parent=1 // pred_region
      %37 = dma.done [#allocation4], 256
    $region17: #{tpu_custom_call.1} parent=1 // pred_fallthru
      _
    %38 = vsyncpa [#allocation3], 1
    %39 = vsyncpa [#allocation4], 1

</llo_original>
